<compile_context>
chip_gen: v5e
topology: v5e:2x2
jax: 0.10.0
libtpu: 0.0.40
codegen_flags: <defaults>
</compile_context>

<pallas_src>
from functools import partial

import jax
import jax.numpy as jnp
from jax.experimental import pallas as pl
from jax.experimental.pallas import tpu as pltpu


_MAX_TILE_N = 2048      # lanes per grid step (multiple of 128); ~128 KiB of x per block
_PALLAS_MIN_ROWS = 256  # below this, plain fused XLA beats kernel dispatch overhead


# ------------------------------- kernels -------------------------------------


def _logits_t(xt_ref, w1t_ref, b1_ref, w2t_ref, b2_ref):
    """Transposed MLP: returns logits^T of shape (n_device, TILE_N), f32."""
    # h^T = relu(W1^T @ x^T + b1)   : (H, TILE_N); f32 accumulate on the MXU.
    h = jnp.dot(w1t_ref[...], xt_ref[...], preferred_element_type=jnp.float32)
    h = jnp.maximum(h + b1_ref[...], 0.0)
    # logits^T = W2^T @ h^T + b2    : (n_device, TILE_N)
    logits = jnp.dot(w2t_ref[...], h, preferred_element_type=jnp.float32)
    return logits + b2_ref[...]


def _softmax_cols_store(logits_t, out_ref):
    """Numerically-stable softmax over the device (sublane) axis; divide on the EUP."""
    lmax = jnp.max(logits_t, axis=0, keepdims=True)      # (1, TILE_N)
    e = jnp.exp(logits_t - lmax)
    s = jnp.sum(e, axis=0, keepdims=True)                # (1, TILE_N)
    out_ref[...] = (e * pl.reciprocal(s, approx=True)).astype(out_ref.dtype)


def _actor_kernel_nomask(xt_ref, w1t_ref, b1_ref, w2t_ref, b2_ref, out_ref):
    _softmax_cols_store(_logits_t(xt_ref, w1t_ref, b1_ref, w2t_ref, b2_ref), out_ref)


def _actor_kernel_masked(xt_ref, w1t_ref, b1_ref, w2t_ref, b2_ref, mbias_ref, out_ref):
    logits_t = _logits_t(xt_ref, w1t_ref, b1_ref, w2t_ref, b2_ref)
    # Additive bias: 0.0 where mask != 0, -inf where mask == 0 (one VPU add, lane-dense).
    logits_t = logits_t + mbias_ref[...]
    _softmax_cols_store(logits_t, out_ref)


# ------------------------------- wrapper --------------------------------------


def _pick_tile_n(n):
    """Lane-tile size: full array for tiny N, otherwise a multiple of 128 capped at
    _MAX_TILE_N and sized so the grid keeps >= 4 steps (v7x two-TensorCore sharding)."""
    if n <= 128:
        return n
    target = -(-n // 4)                      # cdiv(n, 4)
    target = ((target + 127) // 128) * 128   # round up to a lane multiple
    return max(128, min(_MAX_TILE_N, target))


def _dense_forward(x, w1, b1, w2, b2, mask):
    """Plain fused-XLA path for tiny N (kernel dispatch would dominate)."""
    h = jnp.maximum(jnp.dot(x, w1, preferred_element_type=jnp.float32) + b1, 0.0)
    logits = jnp.dot(h, w2, preferred_element_type=jnp.float32) + b2
    if mask is not None:
        bias = jnp.where(jnp.reshape(mask, (-1, 1)) != 0, 0.0, -jnp.inf)
        logits = logits + bias.astype(logits.dtype)
    return jax.nn.softmax(logits, axis=-1)


@partial(jax.jit, static_argnames=("use_pallas",))
def device_softmax_actor(x, w1, b1, w2, b2, mask=None, use_pallas=None):
    """Forward pass of Device_SoftmaxActor.

    x: (N, input_dim); w1: (input_dim, H); b1: (H,); w2: (H, n_device); b2: (n_device,)
    mask: optional (N,) — rows where mask == 0 are set to -inf before the softmax.
          Fully-masked rows produce NaN, matching the PyTorch reference.
    use_pallas: None = auto (kernel when N >= 256), True/False = force.
    """
    n, input_dim = x.shape
    hidden = w1.shape[1]
    n_device = w2.shape[1]

    if use_pallas is None:
        use_pallas = n >= _PALLAS_MIN_ROWS
    if not use_pallas:
        return jnp.squeeze(_dense_forward(x, w1, b1, w2, b2, mask).astype(jnp.float32))

    tile_n = _pick_tile_n(n)
    grid = (pl.cdiv(n, tile_n),)

    # Lane-dense problem: N on the 128-lane axis of every streamed tensor.
    xt = jnp.transpose(x)                                    # (input_dim, N)
    w1t = jnp.transpose(w1)                                   # (H, input_dim)
    w2t = jnp.transpose(w2)                                   # (n_device, H)
    b1c = jnp.reshape(b1, (hidden, 1)).astype(jnp.float32)    # per-sublane column bias
    b2c = jnp.reshape(b2, (n_device, 1)).astype(jnp.float32)

    xt_spec = pl.BlockSpec((input_dim, tile_n), lambda i: (0, i))
    out_spec = pl.BlockSpec((n_device, tile_n), lambda i: (0, i))
    # Constant index maps -> weights/biases DMA'd once, VMEM-resident across grid steps.
    w1_spec = pl.BlockSpec((hidden, input_dim), lambda i: (0, 0))
    b1_spec = pl.BlockSpec((hidden, 1), lambda i: (0, 0))
    w2_spec = pl.BlockSpec((n_device, hidden), lambda i: (0, 0))
    b2_spec = pl.BlockSpec((n_device, 1), lambda i: (0, 0))

    cparams = pltpu.CompilerParams(dimension_semantics=("parallel",))
    out_shape = jax.ShapeDtypeStruct((n_device, n), jnp.float32)

    if mask is None:
        out_t = pl.pallas_call(
            _actor_kernel_nomask,
            out_shape=out_shape,
            grid=grid,
            in_specs=[xt_spec, w1_spec, b1_spec, w2_spec, b2_spec],
            out_specs=out_spec,
            compiler_params=cparams,
        )(xt, w1t, b1c, w2t, b2c)
    else:
        # Additive bias row (lane-dense): 0.0 keeps the logit, -inf masks the row.
        mbias = jnp.where(jnp.reshape(mask, (1, n)) != 0, 0.0, -jnp.inf).astype(jnp.float32)
        mbias_spec = pl.BlockSpec((1, tile_n), lambda i: (0, i))
        out_t = pl.pallas_call(
            _actor_kernel_masked,
            out_shape=out_shape,
            grid=grid,
            in_specs=[xt_spec, w1_spec, b1_spec, w2_spec, b2_spec, mbias_spec],
            out_specs=out_spec,
            compiler_params=cparams,
        )(xt, w1t, b1c, w2t, b2c, mbias)

    # Transpose back to (N, n_device) (layout plumbing), then torch.squeeze semantics.
    return jnp.squeeze(jnp.transpose(out_t))


# ------------------------------ test harness ----------------------------------


def init_params(key, input_dim, hidden_dim, n_device):
    """Deterministic init mimicking torch.nn.Linear (uniform +-1/sqrt(fan_in))."""
    k1, k2, k3, k4 = jax.random.split(key, 4)
    lim1 = 1.0 / jnp.sqrt(jnp.float32(input_dim))
    lim2 = 1.0 / jnp.sqrt(jnp.float32(hidden_dim))
    w1 = jax.random.uniform(k1, (input_dim, hidden_dim), jnp.float32, -lim1, lim1)
    b1 = jax.random.uniform(k2, (hidden_dim,), jnp.float32, -lim1, lim1)
    w2 = jax.random.uniform(k3, (hidden_dim, n_device), jnp.float32, -lim2, lim2)
    b2 = jax.random.uniform(k4, (n_device,), jnp.float32, -lim2, lim2)
    return w1, b1, w2, b2


def _reference(x, w1, b1, w2, b2, mask=None):
    """Plain-JAX f32 reference."""
    h = jnp.maximum(jnp.dot(x, w1) + b1, 0.0)
    logits = jnp.dot(h, w2) + b2
    if mask is not None:
        logits = jnp.where(jnp.reshape(mask, (-1, 1)) != 0, logits, -jnp.inf)
    return jax.nn.softmax(jnp.squeeze(logits), axis=-1)


if __name__ == "__main__":
    # Shapes consistent with the module: N nodes, input_dim features,
    # hidden_dim=32 (module default), n_device output logits.
    N, INPUT_DIM, HIDDEN_DIM, N_DEVICE = 8, 16, 32, 8

    key = jax.random.PRNGKey(0)
    kx, kp, kx2 = jax.random.split(key, 3)
    x = jax.random.normal(kx, (N, INPUT_DIM), jnp.float32)
    w1, b1, w2, b2 = init_params(kp, INPUT_DIM, HIDDEN_DIM, N_DEVICE)

    # --- mask=None path, Pallas kernel forced at the small module-default shape ---
    out = jax.block_until_ready(device_softmax_actor(x, w1, b1, w2, b2, use_pallas=True))
    ref = _reference(x, w1, b1, w2, b2)
    assert out.shape == (N, N_DEVICE)
    assert bool(jnp.all(jnp.abs(jnp.sum(out, axis=-1) - 1.0) < 5e-3))
    assert bool(jnp.all(jnp.abs(out - ref) < 2e-3)), float(jnp.max(jnp.abs(out - ref)))

    # --- masked path (forced kernel): rows with mask == 0 become NaN, matching torch ---
    mask = jnp.array([1, 1, 0, 1, 1, 1, 0, 1], jnp.float32)
    outm = jax.block_until_ready(
        device_softmax_actor(x, w1, b1, w2, b2, mask, use_pallas=True))
    refm = _reference(x, w1, b1, w2, b2, mask)
    keep = mask != 0
    assert bool(jnp.all(jnp.abs(outm[keep] - refm[keep]) < 2e-3))
    assert bool(jnp.all(jnp.isnan(outm[~keep])))

    # --- larger N: auto path takes the kernel, exercises 128-lane tiles, a >= 4 step
    #     parallel grid and a partial last tile ---
    N2 = 1000
    x2 = jax.random.normal(kx2, (N2, INPUT_DIM), jnp.float32)
    out2 = jax.block_until_ready(device_softmax_actor(x2, w1, b1, w2, b2))
    ref2 = _reference(x2, w1, b1, w2, b2)
    assert out2.shape == (N2, N_DEVICE)
    assert bool(jnp.all(jnp.abs(out2 - ref2) < 2e-3))

    # --- tiny-N fast path (plain jnp) agrees with the reference too ---
    out_fast = jax.block_until_ready(device_softmax_actor(x, w1, b1, w2, b2))
    assert bool(jnp.all(jnp.abs(out_fast - ref) < 2e-3))

    print("KERNEL_OK")
</pallas_src>

<mosaic_0001>
module attributes {stable_mosaic.version = 11 : i64} {
  func.func @_actor_kernel_nomask(%arg0: i32, %arg1: memref<16x8xf32, #tpu.memory_space<vmem>>, %arg2: memref<32x16xf32, #tpu.memory_space<vmem>>, %arg3: memref<32x1xf32, #tpu.memory_space<vmem>>, %arg4: memref<8x32xf32, #tpu.memory_space<vmem>>, %arg5: memref<8x1xf32, #tpu.memory_space<vmem>>, %arg6: memref<8x8xf32, #tpu.memory_space<vmem>>) attributes {dimension_semantics = [#tpu.dimension_semantics<parallel>], iteration_bounds = array<i64: 1>, scalar_prefetch = 0 : i64, scratch_operands = 0 : i64, tpu.core_type = #tpu.core_type<tc>, window_params = [{transform_indices = @transform_0, window_bounds = array<i64: 16, 8>}, {pipeline_mode = #tpu.pipeline_mode<synchronous>, transform_indices = @transform_1, window_bounds = array<i64: 32, 16>}, {pipeline_mode = #tpu.pipeline_mode<synchronous>, transform_indices = @transform_2, window_bounds = array<i64: 32, 1>}, {pipeline_mode = #tpu.pipeline_mode<synchronous>, transform_indices = @transform_3, window_bounds = array<i64: 8, 32>}, {pipeline_mode = #tpu.pipeline_mode<synchronous>, transform_indices = @transform_4, window_bounds = array<i64: 8, 1>}, {transform_indices = @transform_5, window_bounds = array<i64: 8, 8>}]} {
    %c0 = arith.constant 0 : index
    %c0_0 = arith.constant 0 : index
    %0 = vector.load %arg2[%c0, %c0_0] : memref<32x16xf32, #tpu.memory_space<vmem>>, vector<32x16xf32>
    %c0_1 = arith.constant 0 : index
    %c0_2 = arith.constant 0 : index
    %1 = vector.load %arg1[%c0_1, %c0_2] : memref<16x8xf32, #tpu.memory_space<vmem>>, vector<16x8xf32>
    %cst = arith.constant dense<0.000000e+00> : vector<32x8xf32>
    %2 = tpu.matmul %0, %1, %cst {dimension_numbers = #tpu.dot_dimension_numbers<[1], [0], [0], [1], [0, 0, 1, 1], [], []>} : vector<32x16xf32>, vector<16x8xf32>, vector<32x8xf32> -> vector<32x8xf32>
    %c0_3 = arith.constant 0 : index
    %c0_4 = arith.constant 0 : index
    %3 = vector.load %arg3[%c0_3, %c0_4] : memref<32x1xf32, #tpu.memory_space<vmem>>, vector<32x1xf32>
    %4 = vector.broadcast %3 : vector<32x1xf32> to vector<32x8xf32>
    %5 = arith.addf %2, %4 : vector<32x8xf32>
    %cst_5 = arith.constant 0.000000e+00 : f32
    %6 = vector.broadcast %cst_5 : f32 to vector<32x8xf32>
    %7 = arith.maximumf %5, %6 : vector<32x8xf32>
    %c0_6 = arith.constant 0 : index
    %c0_7 = arith.constant 0 : index
    %8 = vector.load %arg4[%c0_6, %c0_7] : memref<8x32xf32, #tpu.memory_space<vmem>>, vector<8x32xf32>
    %cst_8 = arith.constant dense<0.000000e+00> : vector<8x8xf32>
    %9 = tpu.matmul %8, %7, %cst_8 {dimension_numbers = #tpu.dot_dimension_numbers<[1], [0], [0], [1], [0, 0, 1, 1], [], []>} : vector<8x32xf32>, vector<32x8xf32>, vector<8x8xf32> -> vector<8x8xf32>
    %c0_9 = arith.constant 0 : index
    %c0_10 = arith.constant 0 : index
    %10 = vector.load %arg5[%c0_9, %c0_10] : memref<8x1xf32, #tpu.memory_space<vmem>>, vector<8x1xf32>
    %11 = vector.broadcast %10 : vector<8x1xf32> to vector<8x8xf32>
    %12 = arith.addf %9, %11 : vector<8x8xf32>
    %cst_11 = arith.constant dense<0xFF800000> : vector<8xf32>
    %13 = vector.multi_reduction <maximumf>, %12, %cst_11 [0] : vector<8x8xf32> to vector<8xf32>
    %14 = vector.shape_cast %13 : vector<8xf32> to vector<1x8xf32>
    %15 = vector.broadcast %14 : vector<1x8xf32> to vector<8x8xf32>
    %16 = arith.subf %12, %15 : vector<8x8xf32>
    %17 = math.exp %16 : vector<8x8xf32>
    %cst_12 = arith.constant dense<0.000000e+00> : vector<8xf32>
    %18 = vector.multi_reduction <add>, %17, %cst_12 [0] : vector<8x8xf32> to vector<8xf32>
    %19 = vector.shape_cast %18 : vector<8xf32> to vector<1x8xf32>
    %20 = tpu.reciprocal %19 {approx = true} : vector<1x8xf32> -> vector<1x8xf32>
    %21 = vector.broadcast %20 : vector<1x8xf32> to vector<8x8xf32>
    %22 = arith.mulf %17, %21 : vector<8x8xf32>
    %c0_13 = arith.constant 0 : index
    %c0_14 = arith.constant 0 : index
    %23 = vector.load %arg6[%c0_13, %c0_14] : memref<8x8xf32, #tpu.memory_space<vmem>>, vector<8x8xf32>
    tpu.vector_store %arg6[%c0_13, %c0_14], %22 {strides = array<i32>} : memref<8x8xf32, #tpu.memory_space<vmem>>, vector<8x8xf32>,
    return
  }
  func.func @transform_0(%arg0: i32) -> (i32, i32) {
    %c0_i32 = arith.constant 0 : i32
    %c0_i32_0 = arith.constant 0 : i32
    return %c0_i32, %arg0 : i32, i32
  }
  func.func @transform_1(%arg0: i32) -> (i32, i32) {
    %c0_i32 = arith.constant 0 : i32
    %c0_i32_0 = arith.constant 0 : i32
    %c0_i32_1 = arith.constant 0 : i32
    return %c0_i32, %c0_i32_0 : i32, i32
  }
  func.func @transform_2(%arg0: i32) -> (i32, i32) {
    %c0_i32 = arith.constant 0 : i32
    %c0_i32_0 = arith.constant 0 : i32
    %c0_i32_1 = arith.constant 0 : i32
    return %c0_i32, %c0_i32_0 : i32, i32
  }
  func.func @transform_3(%arg0: i32) -> (i32, i32) {
    %c0_i32 = arith.constant 0 : i32
    %c0_i32_0 = arith.constant 0 : i32
    %c0_i32_1 = arith.constant 0 : i32
    return %c0_i32, %c0_i32_0 : i32, i32
  }
  func.func @transform_4(%arg0: i32) -> (i32, i32) {
    %c0_i32 = arith.constant 0 : i32
    %c0_i32_0 = arith.constant 0 : i32
    %c0_i32_1 = arith.constant 0 : i32
    return %c0_i32, %c0_i32_0 : i32, i32
  }
  func.func @transform_5(%arg0: i32) -> (i32, i32) {
    %c0_i32 = arith.constant 0 : i32
    %c0_i32_0 = arith.constant 0 : i32
    return %c0_i32, %arg0 : i32, i32
  }
}

</mosaic_0001>

<llo_original>
// kernel: device_softmax_actor.1
$region0: #{device_softmax_actor.1}
  #allocation0 [shape = 'u32[]', space=smem, size = 0x4, offset = 0x4, fixed_abs, tag = 'smem constant byte address 0x4 - core index']
  #allocation1 [shape = 'u32[72,128]{1,0:T(1,128)}', space=vmem, size = 0x9000, scoped, tag = 'internal scratch']
  %s0 = inlined_call_operand.vmem [shape: f32[16,8], index: 0, kind: input, shape index: {}]
  %s1 = inlined_call_operand.vmem [shape: f32[32,16], index: 1, kind: input, shape index: {}]
  %s2 = inlined_call_operand.vmem [shape: f32[32,1], index: 2, kind: input, shape index: {}]
  %s3 = inlined_call_operand.vmem [shape: f32[8,32], index: 3, kind: input, shape index: {}]
  %s4 = inlined_call_operand.vmem [shape: f32[8,1], index: 4, kind: input, shape index: {}]
  %s5 = inlined_call_operand.vmem [shape: f32[8,8], index: 5, kind: output, shape index: {}]
  %s6 = sld [smem:[#allocation0]]
  $region30: #{device_softmax_actor.1} parent=0
    _
  %s8 = ssub.s32 1, %s6
  %s9 = scalar_select 0, %s8, %s6
  // Predicated region
  $region2: #{device_softmax_actor.1} parent=0 // pred_check
    _
  $region3: #{device_softmax_actor.1} parent=0 // pred_check_branch
    %11 = sbr.rel (0) target = $region5
  $region4: #{device_softmax_actor.1} parent=0 // pred_region
    _
  $region5: #{device_softmax_actor.1} parent=0 // pred_fallthru
    _
  // Predicated region
  $region6: #{device_softmax_actor.1} parent=0 // pred_check
    _
  $region7: #{device_softmax_actor.1} parent=0 // pred_check_branch
    %13 = sbr.rel (0) target = $region9
  $region8: #{device_softmax_actor.1} parent=0 // pred_region
    _
  $region9: #{device_softmax_actor.1} parent=0 // pred_fallthru
    _
  // Predicated region
  $region10: #{device_softmax_actor.1} parent=0 // pred_check
    _
  $region11: #{device_softmax_actor.1} parent=0 // pred_check_branch
    %15 = sbr.rel (0) target = $region13
  $region12: #{device_softmax_actor.1} parent=0 // pred_region
    _
  $region13: #{device_softmax_actor.1} parent=0 // pred_fallthru
    _
  // Predicated region
  $region14: #{device_softmax_actor.1} parent=0 // pred_check
    _
  $region15: #{device_softmax_actor.1} parent=0 // pred_check_branch
    %17 = sbr.rel (0) target = $region17
  $region16: #{device_softmax_actor.1} parent=0 // pred_region
    _
  $region17: #{device_softmax_actor.1} parent=0 // pred_fallthru
    _
  // Predicated region
  $region18: #{device_softmax_actor.1} parent=0 // pred_check
    _
  $region19: #{device_softmax_actor.1} parent=0 // pred_check_branch
    %19 = sbr.rel (0) target = $region21
  $region20: #{device_softmax_actor.1} parent=0 // pred_region
    _
  $region21: #{device_softmax_actor.1} parent=0 // pred_fallthru
    _
  %v20 = vld [vmem:[%s1] sm:$0xff]
  %v21 = vld [vmem:[%s1 + $0x8] sm:$0xff]
  %v22 = vld [vmem:[%s1 + $0x10] sm:$0xff]
  %v23 = vld [vmem:[%s1 + $0x18] sm:$0xff]
  %v24 = vld [vmem:[%s0] sm:$0xff]
  %v25 = vld [vmem:[%s0 + $0x8] sm:$0xff]
  %v26 = vld [vmem:[%s2] sm:$0xff]
  %v27 = vld [vmem:[%s2 + $0x8] sm:$0xff]
  %v28 = vld [vmem:[%s2 + $0x10] sm:$0xff]
  %v29 = vld [vmem:[%s2 + $0x18] sm:$0xff]
  %31 = vset.pattern.permute.xlu0 0
  %32 = vperm.xlu0 %31, %v26
  %v33 = vpop.permute.xlu0 %32
  %36 = vset.pattern.permute.xlu0 0
  %37 = vperm.xlu0 %36, %v27
  %v38 = vpop.permute.xlu0 %37
  %41 = vset.pattern.permute.xlu0 0
  %42 = vperm.xlu0 %41, %v28
  %v43 = vpop.permute.xlu0 %42
  %46 = vset.pattern.permute.xlu0 0
  %47 = vperm.xlu0 %46, %v29
  %v48 = vpop.permute.xlu0 %47
  %vm50 = vcmask 130048
  %v52 = vsel %vm50, %v20, 0
  %v55 = vsel %vm50, %v21, 0
  %v58 = vsel %vm50, %v22, 0
  %v61 = vsel %vm50, %v23, 0
  %63 = vmatpush.msra.mxu0 0.0
  %64 = vmatpush.msra.mxu0 0.0
  %65 = vmatpush.msra.mxu0 0.0
  %66 = vmatpush.msra.mxu0 0.0
  %67 = vmatpush.msra.mxu0 0.0
  %68 = vmatpush.msra.mxu0 0.0
  %69 = vmatpush.msra.mxu0 0.0
  %70 = vmatpush.msra.mxu0 0.0
  %71 = vmatpush.msra.mxu0 0.0
  %72 = vmatpush.msra.mxu0 0.0
  %73 = vmatpush.msra.mxu0 0.0
  %74 = vmatpush.msra.mxu0 0.0
  %75 = vmatpush.msra.mxu0 0.0
  %76 = vmatpush.msra.mxu0 0.0
  %77 = vmatpush.msra.mxu0 %v25
  %78 = vmatpush.msra.mxu0 %v24
  %79 = vmatmul.f32.gmra.mxu0 %v52
  %v80 = vpop.f32.mrf.mxu0
  %v81 = vadd.f32 %v33, %v80
  %82 = vmatmul.f32.gmra.mxu0 %v55
  %v83 = vpop.f32.mrf.mxu0
  %v84 = vadd.f32 %v38, %v83
  %85 = vmatmul.f32.gmra.mxu0 %v58
  %v86 = vpop.f32.mrf.mxu0
  %v87 = vadd.f32 %v43, %v86
  %88 = vmatmul.f32.gmra.mxu0 %v61
  %v89 = vpop.f32.mrf.mxu0
  %v90 = vadd.f32 %v48, %v89
  %91 = vdwg.mxu0
  %v92 = vmax.f32 %v81, 0.0
  %v93 = vmax.f32 %v84, 0.0
  %v94 = vmax.f32 %v87, 0.0
  %v95 = vmax.f32 %v90, 0.0
  %v96 = vld [vmem:[%s3] sm:$0xff]
  %v97 = vld [vmem:[%s4] sm:$0xff]
  %99 = vset.pattern.permute.xlu0 0
  %100 = vperm.xlu0 %99, %v97
  %v101 = vpop.permute.xlu0 %100
  %vm103 = vcmask 261120
  %v105 = vsel %vm103, %v96, 0
  %107 = vmatpush.msra.mxu0 0.0
  %108 = vmatpush.msra.mxu0 0.0
  %109 = vmatpush.msra.mxu0 0.0
  %110 = vmatpush.msra.mxu0 0.0
  %111 = vmatpush.msra.mxu0 0.0
  %112 = vmatpush.msra.mxu0 0.0
  %113 = vmatpush.msra.mxu0 0.0
  %114 = vmatpush.msra.mxu0 0.0
  %115 = vmatpush.msra.mxu0 0.0
  %116 = vmatpush.msra.mxu0 0.0
  %117 = vmatpush.msra.mxu0 0.0
  %118 = vmatpush.msra.mxu0 0.0
  %119 = vmatpush.msra.mxu0 %v95
  %120 = vmatpush.msra.mxu0 %v94
  %121 = vmatpush.msra.mxu0 %v93
  %122 = vmatpush.msra.mxu0 %v92
  %123 = vmatmul.f32.gmra.mxu0 %v105
  %v124 = vpop.f32.mrf.mxu0
  %v125 = vadd.f32 %v101, %v124
  %126 = vdwg.mxu0
  %vm127 = vcmask 64512
  %v128 = vsel %vm127, %v125, -inf
  %v129 = vrot.slane %v128, 4
  %v130 = vmax.f32 %v128, %v129
  %v131 = vrot.slane %v130, 2
  %v132 = vmax.f32 %v130, %v131
  %v133 = vrot.slane %v132, 1
  %v134 = vmax.f32 %v132, %v133
  %v135 = vsub.f32 %v125, %v134
  %v136 = vmul.f32 %v135, 1.442695
  %v137 = vpow.pop %v136
  %v138 = vsel %vm127, %v137, 0.0
  %v139 = vrot.slane %v138, 4
  %v140 = vadd.f32 %v138, %v139
  %v141 = vrot.slane %v140, 2
  %v142 = vadd.f32 %v140, %v141
  %v143 = vrot.slane %v142, 1
  %v144 = vadd.f32 %v142, %v143
  %v145 = vrcp.pop %v144
  %v146 = vmul.f32 %v137, %v145
  %147 = vst.msk [vmem:[%s5] sm:$0xff] %vm127, %v146
  // Predicated region
  $region22: #{device_softmax_actor.1} parent=0 // pred_check
    _
  $region23: #{device_softmax_actor.1} parent=0 // pred_check_branch
    %149 = sbr.rel (0) target = $region25
  $region24: #{device_softmax_actor.1} parent=0 // pred_region
    _
  $region25: #{device_softmax_actor.1} parent=0 // pred_fallthru
    _
  // Predicated region
  $region26: #{device_softmax_actor.1} parent=0 // pred_check
    _
  $region27: #{device_softmax_actor.1} parent=0 // pred_check_branch
    %151 = sbr.rel (0) target = $region29
  $region28: #{device_softmax_actor.1} parent=0 // pred_region
    _
  $region29: #{device_softmax_actor.1} parent=0 // pred_fallthru
    _

</llo_original>
